<compile_context>
chip_gen: v7x
topology: tpu7x:2x2x1
jax: 0.10.0
libtpu: 0.0.40
codegen_flags: <defaults>
</compile_context>

<pallas_src>
import functools
import numpy as np

import jax
import jax.numpy as jnp
from jax import lax
from jax.experimental import pallas as pl
from jax.experimental.pallas import tpu as pltpu

F32 = jnp.float32
BF16 = jnp.bfloat16


def _rup(x, m):
    return ((x + m - 1) // m) * m


# ----------------------------------------------------------------------------
# Per-generation configuration
# ----------------------------------------------------------------------------
def _tpu_config():
    phys = None
    try:
        phys = int(pltpu.get_tpu_info().vmem_capacity_bytes)
    except Exception:
        phys = None
    kind = ''
    try:
        kind = jax.devices()[0].device_kind.lower()
    except Exception:
        pass
    is_v5e = ('v5 lite' in kind) or ('v5e' in kind) or ('v5litepod' in kind)
    if phys is None:
        phys = 64 * 1024 * 1024            # conservative (v7x-sized) fallback
    # ~75% of physical VMEM, capped; >=32MiB so small parts still work.
    limit = max(32 * 1024 * 1024, min(int(phys * 3 // 4), 96 * 1024 * 1024))
    return limit, is_v5e


_VMEM_LIMIT, _IS_V5E = _tpu_config()
_TN_MATMUL = 128 if _IS_V5E else 256       # MXU is 128 wide on v5e, 256 on v6e/v7x
_TN_CONV = 128                             # bounds the 9-tap f32 acc to 16 vregs
_K_CHUNK = 512                             # in-kernel K chunk for single-step dots


# ----------------------------------------------------------------------------
# Backend feature probes (run tiny kernels once; fall back gracefully)
# ----------------------------------------------------------------------------
_FEATURES = {}


def _feature(name, probe):
    if name not in _FEATURES:
        try:
            _FEATURES[name] = bool(probe())
        except Exception:
            _FEATURES[name] = False
    return _FEATURES[name]


def _probe_bf16_dynamic_slice():
    # Can Mosaic lower a dynamic (runtime, odd-offset) sublane slice of a bf16
    # VMEM ref?  If yes the fused conv keeps its resident activation in bf16.
    rows = 144

    def k(x_ref, o_ref):
        start = pl.program_id(0) * 8 + 1
        o_ref[...] = x_ref[pl.ds(start, 128), :].astype(F32)

    x = (jnp.arange(rows * 128, dtype=jnp.int32) % 251).astype(BF16)
    x = x.reshape(rows, 128)
    out = pl.pallas_call(
        k,
        out_shape=jax.ShapeDtypeStruct((128, 128), F32),
        grid_spec=pltpu.PrefetchScalarGridSpec(
            num_scalar_prefetch=0, grid=(2,),
            in_specs=[pl.BlockSpec((rows, 128), lambda i: (0, 0))],
            out_specs=pl.BlockSpec((128, 128), lambda i: (0, 0))),
    )(x)
    out = jax.block_until_ready(out)
    return bool(jnp.allclose(out, x[9:137].astype(F32)))


def _probe_buffered_single():
    # Is pipeline_mode=pl.Buffered(1) usable for a constant-index resident
    # input (avoids double-buffering a slab that is only fetched once)?
    spec = pl.BlockSpec((8, 128), lambda i: (0, 0), pipeline_mode=pl.Buffered(1))

    def k(x_ref, o_ref):
        o_ref[...] = x_ref[...] + 1.0

    out = pl.pallas_call(
        k,
        out_shape=jax.ShapeDtypeStruct((8, 128), F32),
        grid_spec=pltpu.PrefetchScalarGridSpec(
            num_scalar_prefetch=0, grid=(2,),
            in_specs=[spec],
            out_specs=pl.BlockSpec((8, 128), lambda i: (0, 0))),
    )(jnp.zeros((8, 128), F32))
    out = jax.block_until_ready(out)
    return bool(jnp.allclose(out, 1.0))


# ----------------------------------------------------------------------------
# Pallas kernels
# ----------------------------------------------------------------------------
def _dot_k_chunked(a_ref, b_ref):
    # Single-K-step matmul with in-kernel K chunking (bounds LHS vreg pressure).
    K = a_ref.shape[1]
    acc = None
    for c0 in range(0, K, _K_CHUNK):
        c1 = min(c0 + _K_CHUNK, K)
        part = jnp.dot(a_ref[:, c0:c1], b_ref[c0:c1, :],
                       preferred_element_type=jnp.float32)
        acc = part if acc is None else acc + part
    return acc


def _mm_kernel(a_ref, b_ref, bias_ref, o_ref, *, relu):
    y = _dot_k_chunked(a_ref, b_ref) + bias_ref[...]
    if relu:
        y = jnp.maximum(y, 0.0)
    o_ref[...] = y.astype(o_ref.dtype)


def _rpn_head_kernel(a_ref, b_ref, bias_ref, o_ref, p_ref):
    # Fused RPN head: one matmul emits [fg-bg score diff (9) | bbox deltas (36)]
    # plus the sigmoid of every column (cols 0..8 == 2-way softmax fg prob).
    y = _dot_k_chunked(a_ref, b_ref) + bias_ref[...]
    o_ref[...] = y
    p_ref[...] = 1.0 / (1.0 + jnp.exp(-y))


def _pool_fc_kernel(x_ref, w_ref, bias_ref, o_ref, p_ref, *, ncls):
    # Global average pool + (cls|bbox) FC + class softmax, all fused.
    pooled = jnp.mean(x_ref[...].astype(jnp.float32), axis=1)        # (tr, C)
    y = jnp.dot(pooled.astype(BF16), w_ref[...],
                preferred_element_type=jnp.float32) + bias_ref[...]
    o_ref[...] = y
    col = lax.broadcasted_iota(jnp.int32, y.shape, 1)
    masked = jnp.where(col < ncls, y, -jnp.inf)
    m = jnp.max(masked, axis=-1, keepdims=True)
    e = jnp.exp(masked - m)
    p_ref[...] = e / jnp.sum(e, axis=-1, keepdims=True)


def _conv_body(x_ref, w_ref, bias_ref, o_ref, extra, *, tm, cp, taps, relu):
    # x_ref : (rows, cp) spatially padded activation, resident in VMEM for the
    #         whole grid (constant index_map); tap (i, j) is a shifted-row slice.
    # w_ref : (ntaps*cp, tn) bf16 weight column (rows ordered (i, j, c)),
    #         fetched once per N column (N is the OUTER grid axis).
    base = pl.multiple_of(pl.program_id(1) * tm, 8)
    tn = o_ref.shape[1]
    acc = jnp.zeros((tm, tn), jnp.float32)
    for t, shift in enumerate(taps):
        a = x_ref[pl.ds(base + shift, tm), :].astype(BF16)
        acc = acc + jnp.dot(a, w_ref[t * cp:(t + 1) * cp, :],
                            preferred_element_type=jnp.float32)
    y = acc + bias_ref[...]
    if extra is not None:
        y = y + extra.astype(jnp.float32)
    if relu:
        y = jnp.maximum(y, 0.0)
    o_ref[...] = y.astype(o_ref.dtype)


def _conv_kernel(x_ref, w_ref, b_ref, o_ref, *, tm, cp, taps, relu):
    _conv_body(x_ref, w_ref, b_ref, o_ref, None,
               tm=tm, cp=cp, taps=taps, relu=relu)


def _conv_res_kernel(x_ref, w_ref, b_ref, r_ref, o_ref, *, tm, cp, taps, relu):
    _conv_body(x_ref, w_ref, b_ref, o_ref, r_ref[...],
               tm=tm, cp=cp, taps=taps, relu=relu)


# ----------------------------------------------------------------------------
# Pallas wrappers
# ----------------------------------------------------------------------------
def _matmul_tiles(M, Np):
    tm = min(128, _rup(M, 8))
    Mp = _rup(M, tm)
    tn = min(Np, _TN_MATMUL)
    if Mp // tm == 1 and Np // tn == 1 and Np >= 256 and (Np // 2) % 128 == 0:
        tn = Np // 2              # keep >=2 grid cells for dual-TC chips
    return tm, Mp, tn


def pallas_matmul(a, pack, relu=False, out_dtype=BF16):
    """y = a @ W + b (optional ReLU); bf16 MXU operands, f32 accumulate."""
    M, K = a.shape
    Kp, Np = pack['w'].shape
    assert K == pack['k']
    tm, Mp, tn = _matmul_tiles(M, Np)
    if a.dtype != BF16:
        a = a.astype(BF16)
    if Mp != M or Kp != K:
        a = jnp.pad(a, ((0, Mp - M), (0, Kp - K)))
    grid = (Np // tn, Mp // tm)     # weight (N) axis OUTER: each weight column
                                    # is DMA'd once and reused across all rows
    out = pl.pallas_call(
        functools.partial(_mm_kernel, relu=relu),
        out_shape=jax.ShapeDtypeStruct((Mp, Np), out_dtype),
        grid_spec=pltpu.PrefetchScalarGridSpec(
            num_scalar_prefetch=0, grid=grid,
            in_specs=[pl.BlockSpec((tm, Kp), lambda j, i: (i, 0)),
                      pl.BlockSpec((Kp, tn), lambda j, i: (0, j)),
                      pl.BlockSpec((1, tn), lambda j, i: (0, j))],
            out_specs=pl.BlockSpec((tm, tn), lambda j, i: (i, j))),
        compiler_params=pltpu.CompilerParams(
            dimension_semantics=("parallel", "parallel"),
            vmem_limit_bytes=_VMEM_LIMIT),
    )(a, pack['w'], pack['b'])
    return out[:M, :pack['n']]


def conv2d_fused(x, pack, pad=1, relu=False, residual=None, out_dtype=BF16):
    """Stride-1 KxK conv on NHWC input via the fused shifted-row kernel.

    The spatially padded activation stays resident in VMEM (bf16 when the
    backend supports dynamic bf16 sublane slices, else f32, single-buffered
    when Buffered(1) is available); each tap is a shifted-row slice accumulated
    on the MXU.  Edge rows are over-computed and discarded by the final slice.
    If the resident slab exceeds the VMEM budget, the row axis is chunked with
    a (KH-1)*Wp halo."""
    N, H, W, C = x.shape
    KH, KW, Cp, O = pack['kh'], pack['kw'], pack['cp'], pack['cout']
    Np = pack['w'].shape[1]
    Hp, Wp = H + 2 * pad, W + 2 * pad
    Wp8 = _rup(Wp, 8)               # sublane-align the row pitch (8-aligned taps)
    OH, OW = Hp - KH + 1, Wp - KW + 1

    use_bf16 = _feature('bf16_dyn_slice', _probe_bf16_dynamic_slice)
    xdtype = BF16 if use_bf16 else F32
    itemsize = 2 if use_bf16 else 4

    xp = jnp.pad(x.astype(xdtype),
                 ((0, 0), (pad, pad), (pad, pad + Wp8 - Wp), (0, Cp - C)))
    M = N * Hp * Wp8                # over-computed output rows (padded coords)
    tm = min(128, _rup(M, 8))
    Mp = _rup(M, tm)
    tn = min(Np, _TN_CONV)
    max_shift = (KH - 1) * Wp8 + (KW - 1)
    taps = tuple(i * Wp8 + j for i in range(KH) for j in range(KW))
    x2d = xp.reshape(M, Cp)

    if residual is not None:
        r = jnp.pad(residual.astype(BF16),
                    ((0, 0), (0, Hp - OH), (0, Wp8 - OW), (0, Np - O)))
        r2d = r.reshape(M, Np)
    else:
        r2d = None

    # VMEM budget for the resident slab (rest is weights/outputs/residual).
    budget = int(_VMEM_LIMIT * 0.6)
    rows_full = _rup(Mp + max_shift, 8)
    if rows_full * Cp * itemsize <= budget:
        chunk_m = Mp
    else:
        chunk_m = max(tm, ((budget // (Cp * itemsize) - max_shift) // tm) * tm)

    buffered_ok = _feature('buffered_single', _probe_buffered_single)

    def x_spec(rows):
        if buffered_ok:
            return pl.BlockSpec((rows, Cp), lambda j, i: (0, 0),
                                pipeline_mode=pl.Buffered(1))
        return pl.BlockSpec((rows, Cp), lambda j, i: (0, 0))

    outs = []
    for c0 in range(0, Mp, chunk_m):
        cm = min(chunk_m, Mp - c0)
        rows = _rup(cm + max_shift, 8)
        xc = x2d[c0:min(c0 + rows, M)]
        if xc.shape[0] < rows:
            xc = jnp.pad(xc, ((0, rows - xc.shape[0]), (0, 0)))
        in_specs = [x_spec(rows),
                    pl.BlockSpec((KH * KW * Cp, tn), lambda j, i: (0, j)),
                    pl.BlockSpec((1, tn), lambda j, i: (0, j))]
        args = [xc, pack['w'], pack['b']]
        if r2d is not None:
            rc = r2d[c0:min(c0 + cm, M)]
            if rc.shape[0] < cm:
                rc = jnp.pad(rc, ((0, cm - rc.shape[0]), (0, 0)))
            in_specs.append(pl.BlockSpec((tm, tn), lambda j, i: (i, j)))
            args.append(rc)
            kernel = functools.partial(_conv_res_kernel, tm=tm, cp=Cp,
                                       taps=taps, relu=relu)
        else:
            kernel = functools.partial(_conv_kernel, tm=tm, cp=Cp,
                                       taps=taps, relu=relu)
        out_c = pl.pallas_call(
            kernel,
            out_shape=jax.ShapeDtypeStruct((cm, Np), out_dtype),
            grid_spec=pltpu.PrefetchScalarGridSpec(
                num_scalar_prefetch=0,
                grid=(Np // tn, cm // tm),    # weight column OUTER, rows inner
                in_specs=in_specs,
                out_specs=pl.BlockSpec((tm, tn), lambda j, i: (i, j))),
            compiler_params=pltpu.CompilerParams(
                dimension_semantics=("parallel", "parallel"),
                vmem_limit_bytes=_VMEM_LIMIT),
        )(*args)
        outs.append(out_c)

    out = outs[0] if len(outs) == 1 else jnp.concatenate(outs, axis=0)
    out = out[:M].reshape(N, Hp, Wp8, Np)
    return out[:, :OH, :OW, :O]


def conv2d_im2col(x, pack, stride, pad, relu=False):
    """KxK conv as bf16 im2col + one matmul.  Used for the 7x7 stem and for the
    stride-2 3x3 blocks (avoids the 4x over-compute of the fused path)."""
    N, H, W, C = x.shape
    KH, KW = pack['kh'], pack['kw']
    xp = jnp.pad(x.astype(BF16), ((0, 0), (pad, pad), (pad, pad), (0, 0)))
    OH = (H + 2 * pad - KH) // stride + 1
    OW = (W + 2 * pad - KW) // stride + 1
    cols = [xp[:, i:i + stride * OH:stride, j:j + stride * OW:stride, :]
            for i in range(KH) for j in range(KW)]
    patches = jnp.concatenate(cols, axis=-1).reshape(N * OH * OW, KH * KW * C)
    y = pallas_matmul(patches, pack, relu=relu)
    return y.reshape(N, OH, OW, pack['n'])


def conv1x1(x, pack, stride=1, relu=False):
    if stride > 1:
        x = x[:, ::stride, ::stride, :]
    N, H, W, C = x.shape
    y = pallas_matmul(x.reshape(N * H * W, C), pack, relu=relu)
    return y.reshape(N, H, W, pack['n'])


def pallas_rpn_head(rc, pack):
    """Fused RPN score(18)+bbox(36) 1x1 convs: one matmul whose columns are
    [fg-bg (9) | deltas (36)], plus the sigmoid epilogue (2-way softmax)."""
    N, Hf, Wf, Cr = rc.shape
    a = rc.reshape(N * Hf * Wf, Cr)
    M, K = a.shape
    Kp, Np = pack['w'].shape
    assert K == pack['k']
    tm, Mp, tn = _matmul_tiles(M, Np)
    if a.dtype != BF16:
        a = a.astype(BF16)
    if Mp != M or Kp != K:
        a = jnp.pad(a, ((0, Mp - M), (0, Kp - K)))
    head, prob = pl.pallas_call(
        _rpn_head_kernel,
        out_shape=(jax.ShapeDtypeStruct((Mp, Np), F32),
                   jax.ShapeDtypeStruct((Mp, Np), F32)),
        grid_spec=pltpu.PrefetchScalarGridSpec(
            num_scalar_prefetch=0, grid=(Np // tn, Mp // tm),
            in_specs=[pl.BlockSpec((tm, Kp), lambda j, i: (i, 0)),
                      pl.BlockSpec((Kp, tn), lambda j, i: (0, j)),
                      pl.BlockSpec((1, tn), lambda j, i: (0, j))],
            out_specs=[pl.BlockSpec((tm, tn), lambda j, i: (i, j)),
                       pl.BlockSpec((tm, tn), lambda j, i: (i, j))]),
        compiler_params=pltpu.CompilerParams(
            dimension_semantics=("parallel", "parallel"),
            vmem_limit_bytes=_VMEM_LIMIT),
    )(a, pack['w'], pack['b'])
    fg_prob = prob[:M, :9].reshape(-1)        # sigmoid(fg-bg) == softmax fg prob
    deltas = head[:M, 9:45].reshape(-1, 4)
    return fg_prob, deltas


def pallas_pool_fc_softmax(x, pack, ncls):
    """Global spatial avg-pool + (cls|bbox) FC head + class softmax, fused."""
    R, HH, WW, C = x.shape
    Kw, Np = pack['w'].shape
    assert Kw == C
    x3 = x.reshape(R, HH * WW, C)
    if x3.dtype != BF16:
        x3 = x3.astype(BF16)
    tr = min(_rup(R, 8), 64)
    Rp = _rup(R, tr)
    if Rp != R:
        x3 = jnp.pad(x3, ((0, Rp - R), (0, 0), (0, 0)))
    head, prob = pl.pallas_call(
        functools.partial(_pool_fc_kernel, ncls=ncls),
        out_shape=(jax.ShapeDtypeStruct((Rp, Np), F32),
                   jax.ShapeDtypeStruct((Rp, Np), F32)),
        grid_spec=pltpu.PrefetchScalarGridSpec(
            num_scalar_prefetch=0, grid=(Rp // tr,),
            in_specs=[pl.BlockSpec((tr, HH * WW, C), lambda i: (i, 0, 0)),
                      pl.BlockSpec((Kw, Np), lambda i: (0, 0)),
                      pl.BlockSpec((1, Np), lambda i: (0, 0))],
            out_specs=[pl.BlockSpec((tr, Np), lambda i: (i, 0)),
                       pl.BlockSpec((tr, Np), lambda i: (i, 0))]),
        compiler_params=pltpu.CompilerParams(
            dimension_semantics=("parallel",),
            vmem_limit_bytes=_VMEM_LIMIT),
    )(x3, pack['w'], pack['b'])
    return prob[:R, :ncls], head[:R, ncls:ncls * 5]


def maxpool_3x3_s2(x):
    # TODO(synk): MaxPool2d(3, 2, 1) stays as XLA reduce_window (cheap here).
    return lax.reduce_window(
        x, jnp.asarray(-jnp.inf, x.dtype), lax.max,
        window_dimensions=(1, 3, 3, 1),
        window_strides=(1, 2, 2, 1),
        padding=((0, 0), (1, 1), (1, 1), (0, 0)))


def basic_block(x, p, stride):
    """torchvision BasicBlock (eval-mode BN folded into the packed weights)."""
    identity = x
    c1 = p['conv1']
    if c1['mode'] == 'im2col':           # stride-2 blocks: im2col, no over-compute
        out = conv2d_im2col(x, c1, stride=stride, pad=1, relu=True)
    else:
        out = conv2d_fused(x, c1, pad=1, relu=True)
    if 'down' in p:
        identity = conv1x1(x, p['down'], stride=stride)
    out = conv2d_fused(out, p['conv2'], pad=1, relu=True, residual=identity)
    return out


# ----------------------------------------------------------------------------
# Deterministic synthetic parameters (BN folded, eval mode) + kernel packing
# ----------------------------------------------------------------------------
class KeyGen:
    def __init__(self, key):
        self.key = key

    def __call__(self):
        self.key, k = jax.random.split(self.key)
        return k


def _init_conv(kg, cout, cin, kh, kw):
    fan_in = cin * kh * kw
    return jax.random.normal(kg(), (cout, cin, kh, kw), F32) / np.sqrt(fan_in)


def _init_bn(kg, c):
    gamma = 1.0 + 0.1 * jax.random.normal(kg(), (c,), F32)
    beta = 0.1 * jax.random.normal(kg(), (c,), F32)
    mean = 0.05 * jax.random.normal(kg(), (c,), F32)
    var = 1.0 + 0.1 * jnp.abs(jax.random.normal(kg(), (c,), F32))
    return gamma, beta, mean, var


def _fold_conv_bn(w, conv_bias, bn, eps=1e-5):
    gamma, beta, mean, var = bn
    scale = gamma / jnp.sqrt(var + eps)
    w_f = w * scale[:, None, None, None]
    b = conv_bias if conv_bias is not None else jnp.zeros(w.shape[0], F32)
    b_f = (b - mean) * scale + beta
    return w_f, b_f


def _init_basic_block(kg, cin, cout, downsample):
    p = {}
    p['w1'], p['b1'] = _fold_conv_bn(_init_conv(kg, cout, cin, 3, 3), None,
                                     _init_bn(kg, cout))
    p['w2'], p['b2'] = _fold_conv_bn(_init_conv(kg, cout, cout, 3, 3), None,
                                     _init_bn(kg, cout))
    if downsample:
        p['dw'], p['db'] = _fold_conv_bn(_init_conv(kg, cout, cin, 1, 1), None,
                                         _init_bn(kg, cout))
    return p


def init_raw_params(seed=1, num_classes=8):
    kg = KeyGen(jax.random.PRNGKey(seed))
    P = {}
    # res4 = resnet34.(conv1, bn1, maxpool, layer1, layer2, layer3)
    P['conv1'] = _fold_conv_bn(_init_conv(kg, 64, 3, 7, 7), None, _init_bn(kg, 64))
    P['layer1'] = [_init_basic_block(kg, 64, 64, False) for _ in range(3)]
    P['layer2'] = ([_init_basic_block(kg, 64, 128, True)] +
                   [_init_basic_block(kg, 128, 128, False) for _ in range(3)])
    P['layer3'] = ([_init_basic_block(kg, 128, 256, True)] +
                   [_init_basic_block(kg, 256, 256, False) for _ in range(5)])
    # RPN head: Conv(256->512,3x3)+BN+ReLU, score 1x1 -> 18, bbox 1x1 -> 36
    rpn_w = _init_conv(kg, 512, 256, 3, 3)
    rpn_b = 0.05 * jax.random.normal(kg(), (512,), F32)
    P['rpn_conv1'] = _fold_conv_bn(rpn_w, rpn_b, _init_bn(kg, 512))
    P['rpn_score'] = (_init_conv(kg, 18, 512, 1, 1),
                      0.05 * jax.random.normal(kg(), (18,), F32))
    P['rpn_bbox'] = (_init_conv(kg, 36, 512, 1, 1),
                     0.05 * jax.random.normal(kg(), (36,), F32))
    # ODN res5: _make_layer(BasicBlock, 512, 3, stride=1) with inplanes=256
    P['res5'] = ([_init_basic_block(kg, 256, 512, True)] +
                 [_init_basic_block(kg, 512, 512, False) for _ in range(2)])
    P['score_fc'] = (jax.random.normal(kg(), (num_classes, 512), F32) / np.sqrt(512),
                     0.05 * jax.random.normal(kg(), (num_classes,), F32))
    P['bbox_fc'] = (jax.random.normal(kg(), (num_classes * 4, 512), F32) / np.sqrt(512),
                    0.05 * jax.random.normal(kg(), (num_classes * 4,), F32))
    return P


def _pack_matmul_wb(w2d, b):
    """(K, N) weight + (N,) bias -> padded bf16 / f32 slabs (packed once)."""
    K, Nn = w2d.shape
    Kp, Np = _rup(K, 128), _rup(Nn, 128)
    wp = jnp.pad(w2d.astype(F32), ((0, Kp - K), (0, Np - Nn))).astype(BF16)
    bias = jnp.pad(b.astype(F32), (0, Np - Nn)).reshape(1, Np)
    return dict(w=wp, b=bias, k=K, n=Nn, mode='matmul')


def _pack_conv_spatial(w, b):
    """(O,C,KH,KW) -> (KH*KW*Cp, Np) bf16 slab, rows ordered (i, j, c)."""
    O, C, KH, KW = w.shape
    Cp, Np = _rup(C, 128), _rup(O, 128)
    wt = jnp.transpose(w, (2, 3, 1, 0))
    wt = jnp.pad(wt, ((0, 0), (0, 0), (0, Cp - C), (0, Np - O)))
    slab = wt.reshape(KH * KW * Cp, Np).astype(BF16)
    bias = jnp.pad(b.astype(F32), (0, Np - O)).reshape(1, Np)
    return dict(w=slab, b=bias, kh=KH, kw=KW, cin=C, cp=Cp, cout=O, mode='spatial')


def _pack_conv1x1(w, b):
    return _pack_matmul_wb(jnp.transpose(w[:, :, 0, 0]), b)


def _pack_conv_im2col(w, b):
    O, C, KH, KW = w.shape
    w2d = jnp.transpose(w, (2, 3, 1, 0)).reshape(KH * KW * C, O)
    pk = _pack_matmul_wb(w2d, b)
    pk.update(kh=KH, kw=KW, cin=C, mode='im2col')
    return pk


def pack_params(raw):
    """Pre-transpose / pad / bf16-cast every weight once (not per forward)."""
    P = {}
    P['conv1'] = _pack_conv_im2col(*raw['conv1'])

    def pack_block(bp, stride):
        if stride > 1:
            c1 = _pack_conv_im2col(bp['w1'], bp['b1'])     # stride-2 path
        else:
            c1 = _pack_conv_spatial(bp['w1'], bp['b1'])
        d = {'conv1': c1, 'conv2': _pack_conv_spatial(bp['w2'], bp['b2'])}
        if 'dw' in bp:
            d['down'] = _pack_conv1x1(bp['dw'], bp['db'])
        return d

    P['layer1'] = [pack_block(bp, 1) for bp in raw['layer1']]
    P['layer2'] = [pack_block(bp, 2 if i == 0 else 1)
                   for i, bp in enumerate(raw['layer2'])]
    P['layer3'] = [pack_block(bp, 2 if i == 0 else 1)
                   for i, bp in enumerate(raw['layer3'])]
    P['res5'] = [pack_block(bp, 1) for bp in raw['res5']]

    P['rpn_conv1'] = _pack_conv_spatial(*raw['rpn_conv1'])
    ws, bs = raw['rpn_score']
    wb, bb = raw['rpn_bbox']
    wst = jnp.transpose(ws[:, :, 0, 0])                    # (512, 18)
    w_diff = wst[:, 9:18] - wst[:, 0:9]                    # fg - bg columns
    b_diff = bs[9:18] - bs[0:9]
    w_head = jnp.concatenate([w_diff, jnp.transpose(wb[:, :, 0, 0])], axis=1)
    P['rpn_head'] = _pack_matmul_wb(w_head, jnp.concatenate([b_diff, bb]))

    wsf, bsf = raw['score_fc']
    wbf, bbf = raw['bbox_fc']
    w_fc = jnp.concatenate([wsf.T, wbf.T], axis=1)         # (512, 5*num_classes)
    P['fc_head'] = _pack_matmul_wb(w_fc, jnp.concatenate([bsf, bbf]))
    return P


# ----------------------------------------------------------------------------
# Proposal layer (anchor decode, clip, top-k) and RoIAlign — plain JAX glue
# ----------------------------------------------------------------------------
def _generate_anchors(base_size=16, ratios=(0.5, 1.0, 2.0), scales=(8, 16, 32)):
    size = base_size * base_size
    ctr = (base_size - 1) / 2.0
    anchors = []
    for r in ratios:
        ws = np.round(np.sqrt(size / r))
        hs = np.round(ws * r)
        for s in scales:
            wss, hss = ws * s, hs * s
            anchors.append([ctr - 0.5 * (wss - 1), ctr - 0.5 * (hss - 1),
                            ctr + 0.5 * (wss - 1), ctr + 0.5 * (hss - 1)])
    return np.asarray(anchors, dtype=np.float32)  # (9, 4)


def proposal_layer(fg_scores, bbox_deltas, feat_hw, im_info,
                   feat_stride=16, num_rois=16):
    # TODO(synk): the reference proposal_layer_py runs pre/post-NMS filtering
    # and CPU NMS; here we do anchor decode + clip + top-k by fg score.
    Hf, Wf = feat_hw
    anchors0 = jnp.asarray(_generate_anchors())
    shift_x = jnp.arange(Wf, dtype=F32) * feat_stride
    shift_y = jnp.arange(Hf, dtype=F32) * feat_stride
    sx, sy = jnp.meshgrid(shift_x, shift_y)
    shifts = jnp.stack([sx.ravel(), sy.ravel(), sx.ravel(), sy.ravel()], axis=1)
    anchors = (shifts[:, None, :] + anchors0[None, :, :]).reshape(-1, 4)

    widths = anchors[:, 2] - anchors[:, 0] + 1.0
    heights = anchors[:, 3] - anchors[:, 1] + 1.0
    ctr_x = anchors[:, 0] + 0.5 * widths
    ctr_y = anchors[:, 1] + 0.5 * heights
    dx, dy = bbox_deltas[:, 0], bbox_deltas[:, 1]
    clip = 4.135166556742356                       # log(1000/16) delta clamp
    dw = jnp.minimum(bbox_deltas[:, 2], clip)
    dh = jnp.minimum(bbox_deltas[:, 3], clip)
    pcx = dx * widths + ctr_x
    pcy = dy * heights + ctr_y
    pw = jnp.exp(dw) * widths
    ph = jnp.exp(dh) * heights
    boxes = jnp.stack([pcx - 0.5 * pw, pcy - 0.5 * ph,
                       pcx + 0.5 * pw, pcy + 0.5 * ph], axis=1)

    im_h, im_w = im_info[0][0], im_info[0][1]
    boxes = jnp.stack([jnp.clip(boxes[:, 0], 0.0, im_w - 1.0),
                       jnp.clip(boxes[:, 1], 0.0, im_h - 1.0),
                       jnp.clip(boxes[:, 2], 0.0, im_w - 1.0),
                       jnp.clip(boxes[:, 3], 0.0, im_h - 1.0)], axis=1)

    k = min(num_rois, boxes.shape[0])
    _, top_idx = lax.top_k(fg_scores, k)
    top_boxes = boxes[top_idx]
    rois = jnp.concatenate([jnp.zeros((k, 1), F32), top_boxes], axis=1)
    return rois  # (k, 5): [batch_idx, x1, y1, x2, y2]


def roi_align(features_nhwc, rois, out_size=7, spatial_scale=1.0 / 16.0):
    # TODO(synk): exact RoIAlignAvg CUDA op ((h+1,w+1) grid + 2x2 avgpool) is
    # approximated by crop-and-resize bilinear sampling; the data-dependent
    # gather stays in plain JAX (fine at R=16).
    f = features_nhwc[0].astype(F32)
    Hf, Wf, _ = f.shape

    def one(roi):
        x1 = roi[1] * spatial_scale
        y1 = roi[2] * spatial_scale
        x2 = roi[3] * spatial_scale
        y2 = roi[4] * spatial_scale
        xs = x1 + (x2 - x1) * jnp.arange(out_size, dtype=F32) / (out_size - 1)
        ys = y1 + (y2 - y1) * jnp.arange(out_size, dtype=F32) / (out_size - 1)
        xs = jnp.clip(xs, 0.0, Wf - 1.0)
        ys = jnp.clip(ys, 0.0, Hf - 1.0)
        x0 = jnp.floor(xs).astype(jnp.int32)
        y0 = jnp.floor(ys).astype(jnp.int32)
        x1i = jnp.minimum(x0 + 1, Wf - 1)
        y1i = jnp.minimum(y0 + 1, Hf - 1)
        wx = xs - x0.astype(F32)
        wy = ys - y0.astype(F32)
        y0g, x0g = jnp.meshgrid(y0, x0, indexing='ij')
        y1g, x1g = jnp.meshgrid(y1i, x1i, indexing='ij')
        wyg, wxg = jnp.meshgrid(wy, wx, indexing='ij')
        wyg = wyg[..., None]
        wxg = wxg[..., None]
        v = (f[y0g, x0g] * (1 - wyg) * (1 - wxg) +
             f[y1g, x0g] * wyg * (1 - wxg) +
             f[y0g, x1g] * (1 - wyg) * wxg +
             f[y1g, x1g] * wyg * wxg)
        return v  # (7, 7, C)

    return jax.vmap(one)(rois)  # (R, 7, 7, C)


# ----------------------------------------------------------------------------
# RPN / ODN / FasterRCNN forward (eval mode)
# ----------------------------------------------------------------------------
def rpn_forward(params, im_data_nchw, im_info, num_rois=16):
    x = jnp.transpose(im_data_nchw, (0, 2, 3, 1))  # NCHW -> NHWC
    # res4 stem: conv1+bn1 (the reference Sequential omits resnet.relu), maxpool
    x = conv2d_im2col(x, params['conv1'], stride=2, pad=3, relu=False)
    x = maxpool_3x3_s2(x)
    for p in params['layer1']:
        x = basic_block(x, p, 1)
    for i, p in enumerate(params['layer2']):
        x = basic_block(x, p, 2 if i == 0 else 1)
    for i, p in enumerate(params['layer3']):
        x = basic_block(x, p, 2 if i == 0 else 1)
    features = x                                    # (1, Hf, Wf, 256) bf16

    rc = conv2d_fused(features, params['rpn_conv1'], pad=1, relu=True)
    _, Hf, Wf, _ = rc.shape
    # fused score/bbox 1x1 convs + 2-way-softmax epilogue (single kernel)
    fg_prob, deltas = pallas_rpn_head(rc, params['rpn_head'])
    rois = proposal_layer(fg_prob, deltas, (Hf, Wf), im_info,
                          feat_stride=16, num_rois=num_rois)
    return features, rois


def odn_forward(params, features_nhwc, rois, num_classes):
    aligned = roi_align(features_nhwc, rois)        # (R, 7, 7, 256)
    x = aligned
    for p in params['res5']:
        x = basic_block(x, p, 1)                    # (R, 7, 7, 512)
    cls_prob, bbox_pred = pallas_pool_fc_softmax(x, params['fc_head'],
                                                 num_classes)
    return cls_prob, bbox_pred


def faster_rcnn_forward(params, im_data, im_info, num_classes=8, num_rois=16):
    # Eval-mode forward: training-only proposal_target_layer / losses skipped.
    features, rois = rpn_forward(params, im_data, im_info, num_rois=num_rois)
    cls_prob, bbox_pred = odn_forward(params, features, rois, num_classes)
    return cls_prob, bbox_pred, rois


# ----------------------------------------------------------------------------
if __name__ == "__main__":
    num_classes = 8     # small synthetic head (module default is 80)
    num_rois = 16

    raw = init_raw_params(seed=1, num_classes=num_classes)
    params = pack_params(raw)

    # Deterministic small input: NCHW image (1, 3, 64, 64) -> 4x4 feature map.
    im_data = jax.random.normal(jax.random.PRNGKey(0), (1, 3, 64, 64), F32)
    im_info = jnp.array([[64.0, 64.0, 1.0]], F32)

    cls_prob, bbox_pred, rois = faster_rcnn_forward(
        params, im_data, im_info, num_classes=num_classes, num_rois=num_rois)
    (cls_prob, bbox_pred, rois) = jax.block_until_ready(
        (cls_prob, bbox_pred, rois))

    assert cls_prob.shape == (num_rois, num_classes)
    assert bbox_pred.shape == (num_rois, num_classes * 4)
    assert rois.shape == (num_rois, 5)
    assert bool(jnp.all(jnp.isfinite(cls_prob)))
    assert bool(jnp.all(jnp.isfinite(bbox_pred)))
    assert bool(jnp.allclose(jnp.sum(cls_prob, axis=-1), 1.0, atol=1e-4))

    print("KERNEL_OK")
</pallas_src>

<mosaic_0001>
module attributes {stable_mosaic.version = 11 : i64} {
  func.func @_mm_kernel(%arg0: i32, %arg1: i32, %arg2: memref<128x256xbf16, #tpu.memory_space<vmem>>, %arg3: memref<256x128xbf16, #tpu.memory_space<vmem>>, %arg4: memref<1x128xf32, #tpu.memory_space<vmem>>, %arg5: memref<128x128xbf16, #tpu.memory_space<vmem>>) attributes {dimension_semantics = [#tpu.dimension_semantics<parallel>, #tpu.dimension_semantics<parallel>], iteration_bounds = array<i64: 1, 8>, scalar_prefetch = 0 : i64, scratch_operands = 0 : i64, tpu.core_type = #tpu.core_type<tc>, window_params = [{transform_indices = @transform_0, window_bounds = array<i64: 128, 256>}, {transform_indices = @transform_1, window_bounds = array<i64: 256, 128>}, {transform_indices = @transform_2, window_bounds = array<i64: 1, 128>}, {transform_indices = @transform_3, window_bounds = array<i64: 128, 128>}]} {
    %c0 = arith.constant 0 : index
    %c0_0 = arith.constant 0 : index
    %0 = vector.load %arg2[%c0, %c0_0] : memref<128x256xbf16, #tpu.memory_space<vmem>>, vector<128x256xbf16>
    %c0_1 = arith.constant 0 : index
    %c0_2 = arith.constant 0 : index
    %1 = vector.load %arg3[%c0_1, %c0_2] : memref<256x128xbf16, #tpu.memory_space<vmem>>, vector<256x128xbf16>
    %cst = arith.constant dense<0.000000e+00> : vector<128x128xf32>
    %2 = tpu.matmul %0, %1, %cst {dimension_numbers = #tpu.dot_dimension_numbers<[1], [0], [0], [1], [0, 0, 1, 1], [], []>} : vector<128x256xbf16>, vector<256x128xbf16>, vector<128x128xf32> -> vector<128x128xf32>
    %c0_3 = arith.constant 0 : index
    %c0_4 = arith.constant 0 : index
    %3 = vector.load %arg4[%c0_3, %c0_4] : memref<1x128xf32, #tpu.memory_space<vmem>>, vector<1x128xf32>
    %4 = vector.broadcast %3 : vector<1x128xf32> to vector<128x128xf32>
    %5 = arith.addf %2, %4 : vector<128x128xf32>
    %6 = arith.truncf %5 : vector<128x128xf32> to vector<128x128xbf16>
    %c0_5 = arith.constant 0 : index
    %c0_6 = arith.constant 0 : index
    %7 = vector.load %arg5[%c0_5, %c0_6] : memref<128x128xbf16, #tpu.memory_space<vmem>>, vector<128x128xbf16>
    tpu.vector_store %arg5[%c0_5, %c0_6], %6 {strides = array<i32>} : memref<128x128xbf16, #tpu.memory_space<vmem>>, vector<128x128xbf16>,
    return
  }
  func.func @transform_0(%arg0: i32, %arg1: i32) -> (i32, i32) {
    %c0_i32 = arith.constant 0 : i32
    %c0_i32_0 = arith.constant 0 : i32
    return %arg1, %c0_i32 : i32, i32
  }
  func.func @transform_1(%arg0: i32, %arg1: i32) -> (i32, i32) {
    %c0_i32 = arith.constant 0 : i32
    %c0_i32_0 = arith.constant 0 : i32
    return %c0_i32, %arg0 : i32, i32
  }
  func.func @transform_2(%arg0: i32, %arg1: i32) -> (i32, i32) {
    %c0_i32 = arith.constant 0 : i32
    %c0_i32_0 = arith.constant 0 : i32
    return %c0_i32, %arg0 : i32, i32
  }
  func.func @transform_3(%arg0: i32, %arg1: i32) -> (i32, i32) {
    %c0_i32 = arith.constant 0 : i32
    return %arg1, %arg0 : i32, i32
  }
}

</mosaic_0001>

<llo_original>
// kernel: tpu_custom_call.1
$region0: #{tpu_custom_call.1}
  #allocation0 [shape = 'u32[]', space=smem, size = 0x4, offset = 0x4, fixed_abs, tag = 'smem constant byte address 0x4 - core index']
  #allocation1 [shape = 'u32[144,128]{1,0:T(1,128)}', space=vmem, size = 0x12000, scoped, tag = 'internal scratch']
  %s0 = inlined_call_operand.hbm [shape: bf16[1024,256], index: 0, kind: input, shape index: {}]
  %s1 = inlined_call_operand.hbm [shape: bf16[256,128], index: 1, kind: input, shape index: {}]
  %s2 = inlined_call_operand.vmem [shape: f32[1,128], index: 2, kind: input, shape index: {}]
  %s3 = inlined_call_operand.hbm [shape: bf16[1024,128], index: 3, kind: output, shape index: {}]
  %s4 = sld [smem:[#allocation0]]
  $region53: #{tpu_custom_call.1} parent=0
    _
  %s6 = ssub.s32 1, %s4
  %s7 = scalar_select 0, %s6, %s4
  $region1: #{tpu_custom_call.1} parent=0
    #allocation2 [shape = 'u8[131072]{0}', space=vmem, size = 0x20000, scoped, tag = 'input window, operand 0']
    #allocation3 [shape = 's32[2]{0}', space=sflag, size = 0x8, scoped, tag = 'scoped memory for tpu_custom_call.1']
    #allocation4 [shape = 's32[2]{0}', space=sflag, size = 0x8, scoped, tag = 'scoped memory for tpu_custom_call.1']
    #allocation5 [shape = 'u8[65536]{0}', space=vmem, size = 0x10000, scoped, tag = 'input window, operand 1, single buffered']
    #allocation6 [shape = 's32[1]{0}', space=sflag, size = 0x4, scoped, tag = 'scoped memory for tpu_custom_call.1']
    #allocation7 [shape = 'u8[65536]{0}', space=vmem, size = 0x10000, scoped, tag = 'output window, operand 0']
    %8 = vsyncpa [#allocation3], 0
    %s9 = scalar_lea.sflag [#allocation3], 1
    %10 = vsyncpa %s9, 0
    %11 = vsyncpa [#allocation6], 0
    %12 = vsyncpa [#allocation4], 0
    %s13 = scalar_lea.sflag [#allocation4], 1
    %14 = vsyncpa %s13, 0
    loop: start=0, step=1, limit=10
    $region2: #{tpu_custom_call.1} parent=1 // loop_pre_header
      _
    $region3: #{tpu_custom_call.1} parent=1 // loop_header
      %s16 = sphi 0, %s20
      %p17 = scmp.ge.s32.totalorder %s16, 10
      %s23 = sphi 0, %s35
      %s24 = sphi 0, %s31
      %s25 = sphi 0, %s23
      %s26 = sphi 0, %s24
      %s27 = sphi 0, %s25
      %s28 = sphi 0, %s26
      %s38 = sphi 0, %s40
      %s41 = sphi 0, %s38
      %s42 = sphi 0, %s41
      %s58 = sphi 0, %s42
      %s64 = sphi 0, %s66
      %s67 = sphi 0, %s64
      %s68 = sphi 0, %s67
      %s84 = sphi 0, %s68
      %s90 = sphi 0, %s92
      %s93 = sphi 0, %s90
      %s94 = sphi 0, %s93
      %s110 = sphi 0, %s94
      %s118 = sphi 0, %s120
      %s121 = sphi 0, %s118
      %s122 = sphi 0, %s121
      %s138 = sphi 0, %s122
    $region4: #{tpu_custom_call.1} parent=1 // loop_header_branch
      %19 = sbr.rel (%p17) target = $region8
    $region5: #{tpu_custom_call.1} parent=1 // loop_body
      %s21 = ssub.s32 %s16, 1
      %s22 = ssub.s32 %s16, 2
      %s29 = sadd.s32 1, %s24
      %p30 = scmp.ge.s32.totalorder %s29, 8
      %s31 = scalar_select %p30, 0, %s29
      %s32 = sadd.s32 1, %s23
      %s33 = scalar_select %p30, %s32, %s23
      %p34 = scmp.ge.s32.totalorder %s33, 1
      %s35 = scalar_select %p34, 0, %s33
      %s36 = ssub.s32 %s24, %s31
      %p37 = scmp.eq.s32.totalorder %s36, 0
      %s39 = sadd.s32 %s38, 1
      %s40 = scalar_select %p37, %s38, %s39
      %p43 = pneg %p37
      %p44 = scmp.eq.s32.totalorder %s16, 7
      %p45 = por %p43, %p44
      %p46 = scmp.ne.s32.totalorder %s38, %s41
      %p47 = scmp.eq.s32.totalorder %s16, 0
      %p48 = por %p46, %p47
      %p49 = scmp.ne.s32.totalorder %s38, %s41
      %p50 = scmp.eq.s32.totalorder %s21, 7
      %p51 = por %p49, %p50
      %p52 = scmp.ne.s32.totalorder %s41, %s42
      %p53 = scmp.eq.s32.totalorder %s21, 0
      %p54 = por %p52, %p53
      %p55 = scmp.ne.s32.totalorder %s41, %s42
      %p56 = scmp.eq.s32.totalorder %s22, 7
      %p57 = por %p55, %p56
      %p59 = scmp.ne.s32.totalorder %s42, %s58
      %p60 = scmp.eq.s32.totalorder %s22, 0
      %p61 = por %p59, %p60
      %s62 = ssub.s32 %s23, %s35
      %p63 = scmp.eq.s32.totalorder %s62, 0
      %s65 = sadd.s32 %s64, 1
      %s66 = scalar_select %p63, %s64, %s65
      %p69 = pneg %p63
      %p70 = scmp.eq.s32.totalorder %s16, 7
      %p71 = por %p69, %p70
      %p72 = scmp.ne.s32.totalorder %s64, %s67
      %p73 = scmp.eq.s32.totalorder %s16, 0
      %p74 = por %p72, %p73
      %p75 = scmp.ne.s32.totalorder %s64, %s67
      %p76 = scmp.eq.s32.totalorder %s21, 7
      %p77 = por %p75, %p76
      %p78 = scmp.ne.s32.totalorder %s67, %s68
      %p79 = scmp.eq.s32.totalorder %s21, 0
      %p80 = por %p78, %p79
      %p81 = scmp.ne.s32.totalorder %s67, %s68
      %p82 = scmp.eq.s32.totalorder %s22, 7
      %p83 = por %p81, %p82
      %p85 = scmp.ne.s32.totalorder %s68, %s84
      %p86 = scmp.eq.s32.totalorder %s22, 0
      %p87 = por %p85, %p86
      %s88 = ssub.s32 %s23, %s35
      %p89 = scmp.eq.s32.totalorder %s88, 0
      %s91 = sadd.s32 %s90, 1
      %s92 = scalar_select %p89, %s90, %s91
      %p95 = pneg %p89
      %p96 = scmp.eq.s32.totalorder %s16, 7
      %p97 = por %p95, %p96
      %p98 = scmp.ne.s32.totalorder %s90, %s93
      %p99 = scmp.eq.s32.totalorder %s16, 0
      %p100 = por %p98, %p99
      %p101 = scmp.ne.s32.totalorder %s90, %s93
      %p102 = scmp.eq.s32.totalorder %s21, 7
      %p103 = por %p101, %p102
      %p104 = scmp.ne.s32.totalorder %s93, %s94
      %p105 = scmp.eq.s32.totalorder %s21, 0
      %p106 = por %p104, %p105
      %p107 = scmp.ne.s32.totalorder %s93, %s94
      %p108 = scmp.eq.s32.totalorder %s22, 7
      %p109 = por %p107, %p108
      %p111 = scmp.ne.s32.totalorder %s94, %s110
      %p112 = scmp.eq.s32.totalorder %s22, 0
      %p113 = por %p111, %p112
      %s114 = ssub.s32 %s24, %s31
      %s115 = ssub.s32 %s23, %s35
      %s116 = sor.u32 %s114, %s115
      %p117 = scmp.eq.s32.totalorder %s116, 0
      %s119 = sadd.s32 %s118, 1
      %s120 = scalar_select %p117, %s118, %s119
      %p123 = pneg %p117
      %p124 = scmp.eq.s32.totalorder %s16, 7
      %p125 = por %p123, %p124
      %p126 = scmp.ne.s32.totalorder %s118, %s121
      %p127 = scmp.eq.s32.totalorder %s16, 0
      %p128 = por %p126, %p127
      %p129 = scmp.ne.s32.totalorder %s118, %s121
      %p130 = scmp.eq.s32.totalorder %s21, 7
      %p131 = por %p129, %p130
      %p132 = scmp.ne.s32.totalorder %s121, %s122
      %p133 = scmp.eq.s32.totalorder %s21, 0
      %p134 = por %p132, %p133
      %p135 = scmp.ne.s32.totalorder %s121, %s122
      %p136 = scmp.eq.s32.totalorder %s22, 7
      %p137 = por %p135, %p136
      %p139 = scmp.ne.s32.totalorder %s122, %s138
      %p140 = scmp.eq.s32.totalorder %s22, 0
      %p141 = por %p139, %p140
      %p142 = scmp.le.s32.totalorder 1, %s16
      %p143 = scmp.lt.s32.totalorder %s16, 9
      %p144 = pnand %p142, %p143
      %p145 = pneg %p144
      // Predicated region
      $region9: #{tpu_custom_call.1} parent=5 // pred_check
        _
      $region10: #{tpu_custom_call.1} parent=5 // pred_check_branch
        %147 = sbr.rel (%p144) target = $region12
      $region11: #{tpu_custom_call.1} parent=5 // pred_region
        %s148 = ssub.s32 %s16, 1
        // Predicated region
        $region13: #{tpu_custom_call.1} parent=11 // pred_check
          %p149 = pneg %p80
        $region14: #{tpu_custom_call.1} parent=11 // pred_check_branch
          %151 = sbr.rel (%p149) target = $region16
        $region15: #{tpu_custom_call.1} parent=11 // pred_region
          %s153 = ssub.s32 2048, 2048
          %154 = vsyncadd [#allocation6], %s153
          %s155 = smul.addr %s25, 64
          %s156 = scalar_lea.hbm %s1, %s155
          %s157 = sshll.u32 [#allocation5], 4
          %s158 = int_to_ptr.vmem [resolvable:$true] %s157
          %163 = dma.hbm_to_vmem [thread:$0]  %s156, 2048, %s158, [#allocation6], 64, 64, 4
        $region16: #{tpu_custom_call.1} parent=11 // pred_fallthru
          _
        // Predicated region
        $region17: #{tpu_custom_call.1} parent=11 // pred_check
          %p164 = pneg %p106
        $region18: #{tpu_custom_call.1} parent=11 // pred_check_branch
          %166 = sbr.rel (%p164) target = $region20
        $region19: #{tpu_custom_call.1} parent=11 // pred_region
          %p167 = scmp.lt.s32.totalorder %s25, 0
          %s168 = scalar_select %p167, %s25, 0
          %s169 = scalar_lea.vmem %s2, %s168
        $region20: #{tpu_custom_call.1} parent=11 // pred_fallthru
          _
      $region12: #{tpu_custom_call.1} parent=5 // pred_fallthru
        _
      %p170 = scmp.lt.s32.totalorder %s16, 8
      // Predicated region
      $region21: #{tpu_custom_call.1} parent=5 // pred_check
        %p171 = pneg %p170
      $region22: #{tpu_custom_call.1} parent=5 // pred_check_branch
        %173 = sbr.rel (%p171) target = $region24
      $region23: #{tpu_custom_call.1} parent=5 // pred_region
        // Predicated region
        $region25: #{tpu_custom_call.1} parent=23 // pred_check
          %p174 = pneg %p48
        $region26: #{tpu_custom_call.1} parent=23 // pred_check_branch
          %176 = sbr.rel (%p174) target = $region28
        $region27: #{tpu_custom_call.1} parent=23 // pred_region
          %s177 = sand.u32 %s38, 1
          %s178 = scalar_lea.sflag [#allocation3], %s177
          %s179 = sand.u32 %s38, 1
          %s180 = smul.addr %s179, 128
          %s181 = scalar_lea.vmem [#allocation2], %s180
          %s182 = smul.u32 16, %s24
          %s184 = ssub.s32 2048, 2048
          %185 = vsyncadd %s178, %s184
          %s186 = smul.addr %s182, 2
          %s187 = smul.addr %s186, 64
          %s188 = scalar_lea.hbm %s0, %s187
          %s189 = sshll.u32 %s181, 4
          %s190 = int_to_ptr.vmem [resolvable:$true] %s189
          %195 = dma.hbm_to_vmem [thread:$0]  %s188, 2048, %s190, %s178, 128, 128, 8
        $region28: #{tpu_custom_call.1} parent=23 // pred_fallthru
          _
      $region24: #{tpu_custom_call.1} parent=5 // pred_fallthru
        _
      %p196 = scmp.le.s32.totalorder 1, %s16
      %p197 = scmp.lt.s32.totalorder %s16, 9
      %p198 = pnand %p196, %p197
      %p199 = pneg %p198
      // Predicated region
      $region29: #{tpu_custom_call.1} parent=5 // pred_check
        _
      $region30: #{tpu_custom_call.1} parent=5 // pred_check_branch
        %201 = sbr.rel (%p198) target = $region32
      $region31: #{tpu_custom_call.1} parent=5 // pred_region
        %s202 = ssub.s32 %s16, 1
        %s203 = sand.u32 %s41, 1
        %s204 = scalar_lea.sflag [#allocation3], %s203
        %s205 = sand.u32 %s41, 1
        %s206 = smul.addr %s205, 128
        %s207 = scalar_lea.vmem [#allocation2], %s206
        // Predicated region
        $region33: #{tpu_custom_call.1} parent=31 // pred_check
          %p208 = pneg %p54
        $region34: #{tpu_custom_call.1} parent=31 // pred_check_branch
          %210 = sbr.rel (%p208) target = $region36
        $region35: #{tpu_custom_call.1} parent=31 // pred_region
          %211 = dma.done %s204, 2048
        $region36: #{tpu_custom_call.1} parent=31 // pred_fallthru
          _
        // Predicated region
        $region37: #{tpu_custom_call.1} parent=31 // pred_check
          %p212 = pneg %p80
        $region38: #{tpu_custom_call.1} parent=31 // pred_check_branch
          %214 = sbr.rel (%p212) target = $region40
        $region39: #{tpu_custom_call.1} parent=31 // pred_region
          %215 = dma.done [#allocation6], 2048
        $region40: #{tpu_custom_call.1} parent=31 // pred_fallthru
          _
        %s216 = sand.u32 %s41, 1
        %s217 = scalar_lea.sflag [#allocation3], %s216
        %s218 = sand.u32 %s41, 1
        %s219 = smul.addr %s218, 128
        %s220 = scalar_lea.vmem [#allocation2], %s219
        %p221 = pneg %p54
        %p222 = pneg %p51
        %p223 = pneg %p80
        %p224 = pneg %p77
        %p225 = scmp.lt.s32.totalorder %s25, 0
        %s226 = scalar_select %p225, %s25, 0
        %s227 = scalar_lea.vmem %s2, %s226
        %p228 = pneg %p106
        %p229 = pneg %p103
        %p230 = pneg %p134
        %p231 = pneg %p131
        %s232 = sand.u32 %s121, 1
        %s233 = scalar_lea.sflag [#allocation4], %s232
        %s234 = sand.u32 %s121, 1
        %s235 = smul.addr %s234, 64
        %s236 = scalar_lea.vmem [#allocation7], %s235
        %s237 = smul.u32 16, %s26
        %p238 = scmp.lt.s32.totalorder %s25, 0
        %s239 = scalar_select %p238, %s25, 0
        %s240 = scalar_lea.vmem %s2, %s239
        %s241 = smul.u32 16, %s26
        %v243 = vld [vmem:[%s207] sm:$0xff]
        %v244 = vld [vmem:[%s207 + $0x8] sm:$0xff]
        %v245 = vld [vmem:[%s207 + $0x10] sm:$0xff]
        %v246 = vld [vmem:[%s207 + $0x18] sm:$0xff]
        %v247 = vld [vmem:[%s207 + $0x20] sm:$0xff]
        %v248 = vld [vmem:[%s207 + $0x28] sm:$0xff]
        %v249 = vld [vmem:[%s207 + $0x30] sm:$0xff]
        %v250 = vld [vmem:[%s207 + $0x38] sm:$0xff]
        %v251 = vld [vmem:[%s207 + $0x40] sm:$0xff]
        %v252 = vld [vmem:[%s207 + $0x48] sm:$0xff]
        %v253 = vld [vmem:[%s207 + $0x50] sm:$0xff]
        %v254 = vld [vmem:[%s207 + $0x58] sm:$0xff]
        %v255 = vld [vmem:[%s207 + $0x60] sm:$0xff]
        %v256 = vld [vmem:[%s207 + $0x68] sm:$0xff]
        %v257 = vld [vmem:[%s207 + $0x70] sm:$0xff]
        %v258 = vld [vmem:[%s207 + $0x78] sm:$0xff]
        %v259 = vld [vmem:[#allocation5] sm:$0xf]
        %v260 = vld [vmem:[#allocation5 + $0x4] sm:$0xf]
        %v261 = vld [vmem:[#allocation5 + $0x8] sm:$0xf]
        %v262 = vld [vmem:[#allocation5 + $0xc] sm:$0xf]
        %v263 = vld [vmem:[#allocation5 + $0x10] sm:$0xf]
        %v264 = vld [vmem:[#allocation5 + $0x14] sm:$0xf]
        %v265 = vld [vmem:[#allocation5 + $0x18] sm:$0xf]
        %v266 = vld [vmem:[#allocation5 + $0x1c] sm:$0xf]
        %v267 = vld [vmem:[#allocation5 + $0x20] sm:$0xf]
        %v268 = vld [vmem:[#allocation5 + $0x24] sm:$0xf]
        %v269 = vld [vmem:[#allocation5 + $0x28] sm:$0xf]
        %v270 = vld [vmem:[#allocation5 + $0x2c] sm:$0xf]
        %v271 = vld [vmem:[#allocation5 + $0x30] sm:$0xf]
        %v272 = vld [vmem:[#allocation5 + $0x34] sm:$0xf]
        %v273 = vld [vmem:[#allocation5 + $0x38] sm:$0xf]
        %v274 = vld [vmem:[#allocation5 + $0x3c] sm:$0xf]
        %v275 = vld [vmem:[#allocation5 + $0x40] sm:$0xf]
        %v276 = vld [vmem:[#allocation5 + $0x44] sm:$0xf]
        %v277 = vld [vmem:[#allocation5 + $0x48] sm:$0xf]
        %v278 = vld [vmem:[#allocation5 + $0x4c] sm:$0xf]
        %v279 = vld [vmem:[#allocation5 + $0x50] sm:$0xf]
        %v280 = vld [vmem:[#allocation5 + $0x54] sm:$0xf]
        %v281 = vld [vmem:[#allocation5 + $0x58] sm:$0xf]
        %v282 = vld [vmem:[#allocation5 + $0x5c] sm:$0xf]
        %v283 = vld [vmem:[#allocation5 + $0x60] sm:$0xf]
        %v284 = vld [vmem:[#allocation5 + $0x64] sm:$0xf]
        %v285 = vld [vmem:[#allocation5 + $0x68] sm:$0xf]
        %v286 = vld [vmem:[#allocation5 + $0x6c] sm:$0xf]
        %v287 = vld [vmem:[#allocation5 + $0x70] sm:$0xf]
        %v288 = vld [vmem:[#allocation5 + $0x74] sm:$0xf]
        %v289 = vld [vmem:[#allocation5 + $0x78] sm:$0xf]
        %v290 = vld [vmem:[#allocation5 + $0x7c] sm:$0xf]
        %v291 = vld [vmem:[%s240] sm:$0x1]
        %v293 = vlaneseq
        %v294 = vshrl.u32 %v293, 7
        %v295 = vsub.s32 0, %v294
        %v296 = vrot.slane %v291, %v295
        %v314 = vunpack.c.l.b16 %v243
        %v315 = vunpack.c.h.b16 %v243
        %v316 = vunpack.c.l.b16 %v244
        %v317 = vunpack.c.h.b16 %v244
        %v318 = vunpack.c.l.b16 %v245
        %v319 = vunpack.c.h.b16 %v245
        %v320 = vunpack.c.l.b16 %v246
        %v321 = vunpack.c.h.b16 %v246
        %v322 = vunpack.c.l.b16 %v247
        %v323 = vunpack.c.h.b16 %v247
        %v324 = vunpack.c.l.b16 %v248
        %v325 = vunpack.c.h.b16 %v248
        %v326 = vunpack.c.l.b16 %v249
        %v327 = vunpack.c.h.b16 %v249
        %v328 = vunpack.c.l.b16 %v250
        %v329 = vunpack.c.h.b16 %v250
        %v330 = vunpack.c.l.b16 %v251
        %v331 = vunpack.c.h.b16 %v251
        %v332 = vunpack.c.l.b16 %v252
        %v333 = vunpack.c.h.b16 %v252
        %v334 = vunpack.c.l.b16 %v253
        %v335 = vunpack.c.h.b16 %v253
        %v336 = vunpack.c.l.b16 %v254
        %v337 = vunpack.c.h.b16 %v254
        %v338 = vunpack.c.l.b16 %v255
        %v339 = vunpack.c.h.b16 %v255
        %v340 = vunpack.c.l.b16 %v256
        %v341 = vunpack.c.h.b16 %v256
        %v342 = vunpack.c.l.b16 %v257
        %v343 = vunpack.c.h.b16 %v257
        %v344 = vunpack.c.l.b16 %v258
        %v345 = vunpack.c.h.b16 %v258
        %v346 = vpack.c.b16 %v316, %v314
        %v347 = vpack.c.b16 %v317, %v315
        %v348 = vpack.c.b16 %v320, %v318
        %v349 = vpack.c.b16 %v321, %v319
        %v350 = vpack.c.b16 %v324, %v322
        %v351 = vpack.c.b16 %v325, %v323
        %v352 = vpack.c.b16 %v328, %v326
        %v353 = vpack.c.b16 %v329, %v327
        %v354 = vpack.c.b16 %v332, %v330
        %v355 = vpack.c.b16 %v333, %v331
        %v356 = vpack.c.b16 %v336, %v334
        %v357 = vpack.c.b16 %v337, %v335
        %v358 = vpack.c.b16 %v340, %v338
        %v359 = vpack.c.b16 %v341, %v339
        %v360 = vpack.c.b16 %v344, %v342
        %v361 = vpack.c.b16 %v345, %v343
        %v410 = vunpack.c.l.b16 %v259
        %v411 = vunpack.c.l.b16 %v260
        %v412 = vunpack.c.l.b16 %v261
        %v413 = vunpack.c.l.b16 %v262
        %v414 = vunpack.c.l.b16 %v263
        %v415 = vunpack.c.l.b16 %v264
        %v416 = vunpack.c.l.b16 %v265
        %v417 = vunpack.c.l.b16 %v266
        %v418 = vunpack.c.l.b16 %v267
        %v419 = vunpack.c.l.b16 %v268
        %v420 = vunpack.c.l.b16 %v269
        %v421 = vunpack.c.l.b16 %v270
        %v422 = vunpack.c.l.b16 %v271
        %v423 = vunpack.c.l.b16 %v272
        %v424 = vunpack.c.l.b16 %v273
        %v425 = vunpack.c.l.b16 %v274
        %v426 = vunpack.c.l.b16 %v275
        %v427 = vunpack.c.l.b16 %v276
        %v428 = vunpack.c.l.b16 %v277
        %v429 = vunpack.c.l.b16 %v278
        %v430 = vunpack.c.l.b16 %v279
        %v431 = vunpack.c.l.b16 %v280
        %v432 = vunpack.c.l.b16 %v281
        %v433 = vunpack.c.l.b16 %v282
        %v434 = vunpack.c.l.b16 %v283
        %v435 = vunpack.c.l.b16 %v284
        %v436 = vunpack.c.l.b16 %v285
        %v437 = vunpack.c.l.b16 %v286
        %v438 = vunpack.c.l.b16 %v287
        %v439 = vunpack.c.l.b16 %v288
        %v440 = vunpack.c.l.b16 %v289
        %v441 = vunpack.c.l.b16 %v290
        %v442 = vpack.c.b16 %v411, %v410
        %v443 = vpack.c.b16 %v413, %v412
        %v444 = vpack.c.b16 %v415, %v414
        %v445 = vpack.c.b16 %v417, %v416
        %v446 = vpack.c.b16 %v419, %v418
        %v447 = vpack.c.b16 %v421, %v420
        %v448 = vpack.c.b16 %v423, %v422
        %v449 = vpack.c.b16 %v425, %v424
        %v450 = vpack.c.b16 %v427, %v426
        %v451 = vpack.c.b16 %v429, %v428
        %v452 = vpack.c.b16 %v431, %v430
        %v453 = vpack.c.b16 %v433, %v432
        %v454 = vpack.c.b16 %v435, %v434
        %v455 = vpack.c.b16 %v437, %v436
        %v456 = vpack.c.b16 %v439, %v438
        %v457 = vpack.c.b16 %v441, %v440
        %474 = vmatprep.subr.bf16.mxu0 0
        %475 = vmatpush1.bf16.msra.mxu0 %v442
        %476 = vmatprep.subr.bf16.mxu0 0
        %477 = vmatpush1.bf16.msra.mxu0 %v443
        %478 = vmatprep.subr.bf16.mxu0 0
        %479 = vmatpush1.bf16.msra.mxu0 %v444
        %480 = vmatprep.subr.bf16.mxu0 0
        %481 = vmatpush1.bf16.msra.mxu0 %v445
        %482 = vmatprep.subr.bf16.mxu0 0
        %483 = vmatpush1.bf16.msra.mxu0 %v446
        %484 = vmatprep.subr.bf16.mxu0 0
        %485 = vmatpush1.bf16.msra.mxu0 %v447
        %486 = vmatprep.subr.bf16.mxu0 0
        %487 = vmatpush1.bf16.msra.mxu0 %v448
        %488 = vmatprep.subr.bf16.mxu0 0
        %489 = vmatpush1.bf16.msra.mxu0 %v449
        %490 = vmatprep.subr.bf16.mxu0 0
        %491 = vmatpush1.bf16.msra.mxu0 %v450
        %492 = vmatprep.subr.bf16.mxu0 0
        %493 = vmatpush1.bf16.msra.mxu0 %v451
        %494 = vmatprep.subr.bf16.mxu0 0
        %495 = vmatpush1.bf16.msra.mxu0 %v452
        %496 = vmatprep.subr.bf16.mxu0 0
        %497 = vmatpush1.bf16.msra.mxu0 %v453
        %498 = vmatprep.subr.bf16.mxu0 0
        %499 = vmatpush1.bf16.msra.mxu0 %v454
        %500 = vmatprep.subr.bf16.mxu0 0
        %501 = vmatpush1.bf16.msra.mxu0 %v455
        %502 = vmatprep.subr.bf16.mxu0 0
        %503 = vmatpush1.bf16.msra.mxu0 %v456
        %504 = vmatprep.subr.bf16.mxu0 0
        %505 = vmatpush1.bf16.msra.mxu0 %v457
        %506 = vmatprep.mubr.bf16.mxu0 %v347
        %507 = vmatmul.mubr.bf16.gmra.mrb[0].mxu0 %v346
        %v508 = vpop.f32.mrb[0].mxu0
        %v509 = vadd.f32 %v296, %v508
        %v510 = vpop.f32.mrb[0].mxu0
        %v511 = vpop.f32.mrb[0].mxu0
        %v512 = vadd.f32 %v296, %v511
        %v513 = vpop.f32.mrb[0].mxu0
        %514 = vmatprep.mubr.bf16.mxu0 %v349
        %515 = vmatmul.mubr.bf16.gmra.mrb[0].mxu0 %v348
        %v516 = vpop.f32.mrb[0].mxu0
        %v517 = vadd.f32 %v296, %v516
        %v518 = vpop.f32.mrb[0].mxu0
        %v519 = vpop.f32.mrb[0].mxu0
        %v520 = vadd.f32 %v296, %v519
        %v521 = vpop.f32.mrb[0].mxu0
        %522 = vmatprep.mubr.bf16.mxu0 %v351
        %523 = vmatmul.mubr.bf16.gmra.mrb[0].mxu0 %v350
        %v524 = vpop.f32.mrb[0].mxu0
        %v525 = vadd.f32 %v296, %v524
        %v526 = vpop.f32.mrb[0].mxu0
        %v527 = vpop.f32.mrb[0].mxu0
        %v528 = vadd.f32 %v296, %v527
        %v529 = vpop.f32.mrb[0].mxu0
        %530 = vmatprep.mubr.bf16.mxu0 %v353
        %531 = vmatmul.mubr.bf16.gmra.mrb[0].mxu0 %v352
        %v532 = vpop.f32.mrb[0].mxu0
        %v533 = vadd.f32 %v296, %v532
        %v534 = vpop.f32.mrb[0].mxu0
        %v535 = vpop.f32.mrb[0].mxu0
        %v536 = vadd.f32 %v296, %v535
        %v537 = vpop.f32.mrb[0].mxu0
        %538 = vmatprep.mubr.bf16.mxu0 %v355
        %539 = vmatmul.mubr.bf16.gmra.mrb[0].mxu0 %v354
        %v540 = vpop.f32.mrb[0].mxu0
        %v541 = vadd.f32 %v296, %v540
        %v542 = vpop.f32.mrb[0].mxu0
        %v543 = vpop.f32.mrb[0].mxu0
        %v544 = vadd.f32 %v296, %v543
        %v545 = vpop.f32.mrb[0].mxu0
        %546 = vmatprep.mubr.bf16.mxu0 %v357
        %547 = vmatmul.mubr.bf16.gmra.mrb[0].mxu0 %v356
        %v548 = vpop.f32.mrb[0].mxu0
        %v549 = vadd.f32 %v296, %v548
        %v550 = vpop.f32.mrb[0].mxu0
        %v551 = vpop.f32.mrb[0].mxu0
        %v552 = vadd.f32 %v296, %v551
        %v553 = vpop.f32.mrb[0].mxu0
        %554 = vmatprep.mubr.bf16.mxu0 %v359
        %555 = vmatmul.mubr.bf16.gmra.mrb[0].mxu0 %v358
        %v556 = vpop.f32.mrb[0].mxu0
        %v557 = vadd.f32 %v296, %v556
        %v558 = vpop.f32.mrb[0].mxu0
        %v559 = vpop.f32.mrb[0].mxu0
        %v560 = vadd.f32 %v296, %v559
        %v561 = vpop.f32.mrb[0].mxu0
        %562 = vmatprep.mubr.bf16.mxu0 %v361
        %563 = vmatmul.mubr.bf16.gmra.mrb[0].mxu0 %v360
        %v564 = vpop.f32.mrb[0].mxu0
        %v565 = vadd.f32 %v296, %v564
        %v566 = vpop.f32.mrb[0].mxu0
        %v567 = vpop.f32.mrb[0].mxu0
        %v568 = vadd.f32 %v296, %v567
        %v569 = vpop.f32.mrb[0].mxu0
        %570 = vdwg.mxu0
        %v571 = vpack.c.bf16 %v512, %v509
        %v572 = vpack.c.bf16 %v520, %v517
        %v573 = vpack.c.bf16 %v528, %v525
        %v574 = vpack.c.bf16 %v536, %v533
        %v575 = vpack.c.bf16 %v544, %v541
        %v576 = vpack.c.bf16 %v552, %v549
        %v577 = vpack.c.bf16 %v560, %v557
        %v578 = vpack.c.bf16 %v568, %v565
        %v587 = vunpack.c.l.b16 %v571
        %v588 = vunpack.c.h.b16 %v571
        %v589 = vunpack.c.l.b16 %v572
        %v590 = vunpack.c.h.b16 %v572
        %v591 = vunpack.c.l.b16 %v573
        %v592 = vunpack.c.h.b16 %v573
        %v593 = vunpack.c.l.b16 %v574
        %v594 = vunpack.c.h.b16 %v574
        %v595 = vunpack.c.l.b16 %v575
        %v596 = vunpack.c.h.b16 %v575
        %v597 = vunpack.c.l.b16 %v576
        %v598 = vunpack.c.h.b16 %v576
        %v599 = vunpack.c.l.b16 %v577
        %v600 = vunpack.c.h.b16 %v577
        %v601 = vunpack.c.l.b16 %v578
        %v602 = vunpack.c.h.b16 %v578
        %v603 = vpack.c.b16 %v587, %v587
        %v604 = vpack.c.b16 %v588, %v588
        %v605 = vpack.c.b16 %v589, %v589
        %v606 = vpack.c.b16 %v590, %v590
        %v607 = vpack.c.b16 %v591, %v591
        %v608 = vpack.c.b16 %v592, %v592
        %v609 = vpack.c.b16 %v593, %v593
        %v610 = vpack.c.b16 %v594, %v594
        %v611 = vpack.c.b16 %v595, %v595
        %v612 = vpack.c.b16 %v596, %v596
        %v613 = vpack.c.b16 %v597, %v597
        %v614 = vpack.c.b16 %v598, %v598
        %v615 = vpack.c.b16 %v599, %v599
        %v616 = vpack.c.b16 %v600, %v600
        %v617 = vpack.c.b16 %v601, %v601
        %v618 = vpack.c.b16 %v602, %v602
        %635 = vst [vmem:[%s236] sm:$0xf] %v603
        %636 = vst [vmem:[%s236 + $0x4] sm:$0xf] %v604
        %637 = vst [vmem:[%s236 + $0x8] sm:$0xf] %v605
        %638 = vst [vmem:[%s236 + $0xc] sm:$0xf] %v606
        %639 = vst [vmem:[%s236 + $0x10] sm:$0xf] %v607
        %640 = vst [vmem:[%s236 + $0x14] sm:$0xf] %v608
        %641 = vst [vmem:[%s236 + $0x18] sm:$0xf] %v609
        %642 = vst [vmem:[%s236 + $0x1c] sm:$0xf] %v610
        %643 = vst [vmem:[%s236 + $0x20] sm:$0xf] %v611
        %644 = vst [vmem:[%s236 + $0x24] sm:$0xf] %v612
        %645 = vst [vmem:[%s236 + $0x28] sm:$0xf] %v613
        %646 = vst [vmem:[%s236 + $0x2c] sm:$0xf] %v614
        %647 = vst [vmem:[%s236 + $0x30] sm:$0xf] %v615
        %648 = vst [vmem:[%s236 + $0x34] sm:$0xf] %v616
        %649 = vst [vmem:[%s236 + $0x38] sm:$0xf] %v617
        %650 = vst [vmem:[%s236 + $0x3c] sm:$0xf] %v618
        %s651 = sand.u32 %s121, 1
        %s652 = scalar_lea.sflag [#allocation4], %s651
        %s653 = sand.u32 %s121, 1
        %s654 = smul.addr %s653, 64
        %s655 = scalar_lea.vmem [#allocation7], %s654
        // Predicated region
        $region41: #{tpu_custom_call.1} parent=31 // pred_check
          %p656 = pneg %p131
        $region42: #{tpu_custom_call.1} parent=31 // pred_check_branch
          %658 = sbr.rel (%p656) target = $region44
        $region43: #{tpu_custom_call.1} parent=31 // pred_region
          %s659 = smul.u32 16, %s26
          %s661 = ssub.s32 1024, 1024
          %662 = vsyncadd %s652, %s661
          %s663 = sadd.s32 %s25, %s659
          %s664 = smul.addr %s663, 64
          %s665 = scalar_lea.hbm %s3, %s664
          %s666 = sshll.u32 %s655, 4
          %s667 = int_to_ptr.vmem [resolvable:$true] %s666
          %672 = dma.vmem_to_hbm [thread:$0]  %s667, 1024, %s665, %s652, 64, 64, 4
        $region44: #{tpu_custom_call.1} parent=31 // pred_fallthru
          _
      $region32: #{tpu_custom_call.1} parent=5 // pred_fallthru
        _
      %p673 = scmp.le.s32.totalorder 2, %s16
      // Predicated region
      $region45: #{tpu_custom_call.1} parent=5 // pred_check
        %p674 = pneg %p673
      $region46: #{tpu_custom_call.1} parent=5 // pred_check_branch
        %676 = sbr.rel (%p674) target = $region48
      $region47: #{tpu_custom_call.1} parent=5 // pred_region
        %s677 = ssub.s32 %s16, 2
        // Predicated region
        $region49: #{tpu_custom_call.1} parent=47 // pred_check
          %p678 = pneg %p137
        $region50: #{tpu_custom_call.1} parent=47 // pred_check_branch
          %680 = sbr.rel (%p678) target = $region52
        $region51: #{tpu_custom_call.1} parent=47 // pred_region
          %s681 = sand.u32 %s122, 1
          %s682 = scalar_lea.sflag [#allocation4], %s681
          %s683 = sand.u32 %s122, 1
          %s684 = smul.addr %s683, 64
          %s685 = scalar_lea.vmem [#allocation7], %s684
          %686 = dma.done %s682, 1024
        $region52: #{tpu_custom_call.1} parent=47 // pred_fallthru
          _
      $region48: #{tpu_custom_call.1} parent=5 // pred_fallthru
        _
    $region6: #{tpu_custom_call.1} parent=1 // loop_footer
      %s20 = sadd.s32 1, %s16
    $region7: #{tpu_custom_call.1} parent=1 // loop_footer_branch
      %15 = sbr.rel target = $region3
    $region8: #{tpu_custom_call.1} parent=1 // loop_exit
      _
    %687 = vsyncpa [#allocation3], 1
    %s688 = scalar_lea.sflag [#allocation3], 1
    %689 = vsyncpa %s688, 1
    %690 = vsyncpa [#allocation6], 1
    %691 = vsyncpa [#allocation4], 1
    %s692 = scalar_lea.sflag [#allocation4], 1
    %693 = vsyncpa %s692, 1

</llo_original>
